<compile_context>
chip_gen: v6e
topology: v6e:2x2x1
jax: 0.10.0
libtpu: 0.0.40
codegen_flags: <defaults>
</compile_context>

<pallas_src>
import math
import functools

import jax
import jax.numpy as jnp
from jax.experimental import pallas as pl
from jax.experimental.pallas import tpu as pltpu


_MAX_BLOCK_BYTES = 8 * 1024 * 1024       # cap on one input block (roofline plateau)
_FALLBACK_VMEM_LIMIT = 32 * 1024 * 1024  # safe everywhere if HW query fails


def _round_up(x, m):
    return ((x + m - 1) // m) * m


@functools.lru_cache(maxsize=None)
def _vmem_limit_bytes():
    # Per-generation scoped-VMEM limit: ~3/4 of physical VMEM, capped at 96 MiB.
    # v5e/v6e (128 MiB physical) -> 96 MiB; v7x (64 MiB physical) -> 48 MiB.
    try:
        cap = int(pltpu.get_tpu_info().vmem_capacity_bytes)
        return min(max(cap * 3 // 4, _FALLBACK_VMEM_LIMIT), 96 * 1024 * 1024)
    except Exception:
        return _FALLBACK_VMEM_LIMIT


def _sublane(itemsize):
    # Sublane packing: 8 rows for 4-byte, 16 for 2-byte, 32 for 1-byte dtypes.
    return max(8, 32 // max(1, itemsize))


def _compiler_params(n_grid_dims):
    return pltpu.CompilerParams(
        dimension_semantics=("parallel",) * n_grid_dims,
        vmem_limit_bytes=_vmem_limit_bytes(),
    )


def _block_elems(itemsize, n_f32_temps):
    """Max elements per input block, budgeting VMEM for double-buffered
    in+out pipeline copies plus live f32 upcast temporaries."""
    limit = _vmem_limit_bytes()
    per_elem = 4 * itemsize + 4 * n_f32_temps   # 2x(in+out) + f32 temps
    elems = int(limit * 0.55) // max(1, per_elem)
    elems = min(elems, _MAX_BLOCK_BYTES // max(1, itemsize))
    return max(elems, 8 * 128)


def _fast_recip(x):
    # EUP approximate reciprocal + one Newton-Raphson refinement.  Only used
    # where the argument is guaranteed finite and >= 1 (softmax denominator).
    r = pl.reciprocal(x, approx=True)
    return r * (2.0 - x * r)


# ---------------------------------------------------------------------------
# Kernels (operate on one VMEM block)
# ---------------------------------------------------------------------------

def _relu_kernel(x_ref, o_ref):
    x = x_ref[...]
    o_ref[...] = jnp.maximum(x, 0)


def _sigmoid_kernel(x_ref, o_ref):
    # sigmoid(x) = 0.5 * tanh(0.5 * x) + 0.5  (one EUP op, no exp overflow).
    x = x_ref[...].astype(jnp.float32)
    o_ref[...] = (0.5 * jnp.tanh(0.5 * x) + 0.5).astype(o_ref.dtype)


def _softmax_last_kernel(x_ref, o_ref):
    # Numerically-stable softmax along the last (lane) axis of a
    # (tile_rows, C) block.
    x = x_ref[...].astype(jnp.float32)
    m = jnp.max(x, axis=-1, keepdims=True)
    e = jnp.exp(x - m)
    s = jnp.sum(e, axis=-1, keepdims=True)     # s in [1, C]: recip is safe
    o_ref[...] = (e * _fast_recip(s)).astype(o_ref.dtype)


def _softmax_mid_kernel(x_ref, o_ref):
    # Softmax along the middle axis of a (tile_outer, C, tile_inner) block
    # (sublane reduce; the `inner` axis stays lane-dense).
    x = x_ref[...].astype(jnp.float32)
    m = jnp.max(x, axis=1, keepdims=True)
    e = jnp.exp(x - m)
    s = jnp.sum(e, axis=1, keepdims=True)
    o_ref[...] = (e * _fast_recip(s)).astype(o_ref.dtype)


# ---------------------------------------------------------------------------
# Tiling helpers / launchers
# ---------------------------------------------------------------------------

def _run_rows(kernel, x2d, n_f32_temps=0):
    """Run `kernel` over a (rows, cols) array, tiled along rows only."""
    rows, cols = x2d.shape
    itemsize = x2d.dtype.itemsize
    sub = _sublane(itemsize)

    elems = _block_elems(itemsize, n_f32_temps)
    budget_rows = max(1, elems // max(1, cols))
    tile_rows = max(sub, (budget_rows // sub) * sub)
    if tile_rows >= rows:
        if rows > sub:
            # Keep >=2 grid steps so both v7x TensorCores get work.
            tile_rows = _round_up(pl.cdiv(rows, 2), sub)
        else:
            tile_rows = rows

    grid = (pl.cdiv(rows, tile_rows),)
    return pl.pallas_call(
        kernel,
        out_shape=jax.ShapeDtypeStruct((rows, cols), x2d.dtype),
        grid=grid,
        in_specs=[pl.BlockSpec((tile_rows, cols), lambda i: (i, 0))],
        out_specs=pl.BlockSpec((tile_rows, cols), lambda i: (i, 0)),
        compiler_params=_compiler_params(1),
    )(x2d)


def _elementwise(kernel, x, n_f32_temps=0):
    """Apply an elementwise kernel to a tensor of any shape."""
    shape = x.shape
    n = x.size
    if n == 0:
        return x
    # Re-view the flat data as (rows, K) with K a large multiple of 128 so the
    # lane axis is fully dense (pure metadata reshape, no extra HBM pass).
    cols = None
    for k in (4096, 2048, 1024, 512, 256, 128):
        if n % k == 0:
            cols = k
            break
    if cols is not None:
        y2d = _run_rows(kernel, x.reshape(-1, cols), n_f32_temps)
        return y2d.reshape(shape)
    # No 128-multiple factoring: pad the flat view once to a lane-dense width
    # (one cheap extra pass) rather than running the whole kernel lane-sparse
    # with masked vst.msk stores.
    cols = 1024 if n >= 1024 else 128
    n_pad = _round_up(n, cols)
    flat = jnp.pad(x.reshape(-1), (0, n_pad - n))
    y2d = _run_rows(kernel, flat.reshape(-1, cols), n_f32_temps)
    return y2d.reshape(-1)[:n].reshape(shape)


def _softmax(x, dim):
    shape = x.shape
    if x.ndim == 0:
        return jnp.ones_like(x)
    dim = dim % x.ndim
    c = shape[dim]
    itemsize = x.dtype.itemsize
    sub = _sublane(itemsize)

    if dim == x.ndim - 1:
        # Reduce along lanes: (rows, C) with C whole in every block.
        # TODO(synk): for C < 128 with 128 % C == 0 a lane-packed segmented
        # reduce would restore unmasked full-width stores; kept simple here.
        x2d = x.reshape(-1, c)
        return _run_rows(_softmax_last_kernel, x2d, n_f32_temps=3).reshape(shape)

    # Softmax over a non-trailing axis: view as (outer, C, inner), keep the
    # trailing `inner` axis on lanes and reduce over the middle (sublane) axis
    # inside the kernel.  Avoids the full HBM transpose of a moveaxis and
    # keeps lane density even when C is tiny (e.g. NCHW channels).
    outer = math.prod(shape[:dim]) if dim > 0 else 1
    inner = math.prod(shape[dim + 1:])
    x3d = x.reshape(outer, c, inner)

    c_pad = _round_up(c, sub)                 # physical sublane padding of C
    elems = _block_elems(itemsize, 3)
    if inner % 128 == 0:
        tile_inner = min(inner, max(128, (elems // c_pad // 128) * 128))
    else:
        tile_inner = inner
    tile_outer = min(outer, max(1, elems // max(1, c_pad * tile_inner)))

    # Keep >=2 total grid steps so both v7x TensorCores get work.
    if pl.cdiv(outer, tile_outer) * pl.cdiv(inner, tile_inner) == 1:
        if outer >= 2:
            tile_outer = pl.cdiv(outer, 2)
        elif inner % 128 == 0 and inner >= 256:
            tile_inner = _round_up(pl.cdiv(inner, 2), 128)

    grid = (pl.cdiv(outer, tile_outer), pl.cdiv(inner, tile_inner))
    out3d = pl.pallas_call(
        _softmax_mid_kernel,
        out_shape=jax.ShapeDtypeStruct((outer, c, inner), x.dtype),
        grid=grid,
        in_specs=[pl.BlockSpec((tile_outer, c, tile_inner),
                               lambda i, j: (i, 0, j))],
        out_specs=pl.BlockSpec((tile_outer, c, tile_inner),
                               lambda i, j: (i, 0, j)),
        compiler_params=_compiler_params(2),
    )(x3d)
    return out3d.reshape(shape)


# ---------------------------------------------------------------------------
# Module-equivalent wrapper
# ---------------------------------------------------------------------------

class Activation:
    """JAX/Pallas equivalent of the PyTorch `Activation` module (forward)."""

    def __init__(self, activation, **kwargs):
        activation = activation.lower()
        if activation not in ("relu", "sigmoid", "softmax"):
            raise ValueError(f"activation {activation} is invalid.")
        self.name = activation
        # nn.Softmax(dim=...); default -1 (legacy implicit-dim behaviour of
        # old torch is not reproduced).
        self.dim = kwargs.get("dim", -1)
        # TODO(synk): nn.ReLU(inplace=True) flag has no meaning in functional JAX.

    def __call__(self, x):
        if self.name == "relu":
            return _elementwise(_relu_kernel, x, n_f32_temps=0)
        if self.name == "sigmoid":
            return _elementwise(_sigmoid_kernel, x, n_f32_temps=2)
        return _softmax(x, self.dim)


# ---------------------------------------------------------------------------
# Demo / self-test
# ---------------------------------------------------------------------------

if __name__ == "__main__":
    key = jax.random.PRNGKey(0)
    x = jax.random.normal(key, (2, 4, 16, 16), dtype=jnp.float32)  # NCHW

    # ReLU
    y_relu = jax.block_until_ready(Activation("relu")(x))
    assert y_relu.shape == x.shape
    assert jnp.allclose(y_relu, jnp.maximum(x, 0.0), atol=1e-6)

    # Sigmoid (tanh formulation; check extreme values too)
    y_sig = jax.block_until_ready(Activation("sigmoid")(x))
    assert jnp.allclose(y_sig, jax.nn.sigmoid(x), atol=1e-5)
    x_ext = jnp.array([[-200.0, -50.0, 0.0, 50.0, 200.0]] * 2, dtype=jnp.float32)
    y_ext = jax.block_until_ready(Activation("sigmoid")(x_ext))
    assert jnp.all(jnp.isfinite(y_ext))
    assert jnp.allclose(y_ext, jax.nn.sigmoid(x_ext), atol=1e-5)

    # Softmax over channel dim (nn.Softmax(dim=1)) — non-trailing-axis path.
    y_sm = jax.block_until_ready(Activation("softmax", dim=1)(x))
    assert jnp.allclose(y_sm, jax.nn.softmax(x, axis=1), atol=1e-5)
    assert jnp.allclose(jnp.sum(y_sm, axis=1),
                        jnp.ones(x.shape[:1] + x.shape[2:]), atol=1e-4)

    # Softmax over the last dim — lane-reduction path.
    x2 = jax.random.normal(jax.random.PRNGKey(0), (2, 8, 32), dtype=jnp.float32)
    y_sm2 = jax.block_until_ready(Activation("softmax", dim=-1)(x2))
    assert jnp.allclose(y_sm2, jax.nn.softmax(x2, axis=-1), atol=1e-5)

    # Non-128-factor shape — padded lane-dense fallback path.
    x3 = jax.random.normal(jax.random.PRNGKey(1), (3, 5, 7), dtype=jnp.float32)
    y3 = jax.block_until_ready(Activation("relu")(x3))
    assert jnp.allclose(y3, jnp.maximum(x3, 0.0), atol=1e-6)

    print("KERNEL_OK")
</pallas_src>

<mosaic_0001>
module attributes {stable_mosaic.version = 11 : i64} {
  func.func @_relu_kernel(%arg0: i32, %arg1: memref<1x2048xf32, #tpu.memory_space<vmem>>, %arg2: memref<1x2048xf32, #tpu.memory_space<vmem>>) attributes {dimension_semantics = [#tpu.dimension_semantics<parallel>], iteration_bounds = array<i64: 1>, scalar_prefetch = 0 : i64, scratch_operands = 0 : i64, tpu.core_type = #tpu.core_type<tc>, window_params = [{transform_indices = @transform_0, window_bounds = array<i64: 1, 2048>}, {transform_indices = @transform_1, window_bounds = array<i64: 1, 2048>}]} {
    %c0 = arith.constant 0 : index
    %c0_0 = arith.constant 0 : index
    %0 = vector.load %arg1[%c0, %c0_0] : memref<1x2048xf32, #tpu.memory_space<vmem>>, vector<1x2048xf32>
    %cst = arith.constant 0.000000e+00 : f32
    %1 = vector.broadcast %cst : f32 to vector<1x2048xf32>
    %2 = arith.maximumf %0, %1 : vector<1x2048xf32>
    %c0_1 = arith.constant 0 : index
    %c0_2 = arith.constant 0 : index
    %3 = vector.load %arg2[%c0_1, %c0_2] : memref<1x2048xf32, #tpu.memory_space<vmem>>, vector<1x2048xf32>
    tpu.vector_store %arg2[%c0_1, %c0_2], %2 {strides = array<i32>} : memref<1x2048xf32, #tpu.memory_space<vmem>>, vector<1x2048xf32>,
    return
  }
  func.func @transform_0(%arg0: i32) -> (i32, i32) {
    %c0_i32 = arith.constant 0 : i32
    %c0_i32_0 = arith.constant 0 : i32
    return %arg0, %c0_i32 : i32, i32
  }
  func.func @transform_1(%arg0: i32) -> (i32, i32) {
    %c0_i32 = arith.constant 0 : i32
    %c0_i32_0 = arith.constant 0 : i32
    return %arg0, %c0_i32 : i32, i32
  }
}

</mosaic_0001>

<llo_original>
// kernel: tpu_custom_call.1
$region0: #{tpu_custom_call.1}
  #allocation0 [shape = 'u32[]', space=smem, size = 0x4, offset = 0x4, fixed_abs, tag = 'smem constant byte address 0x4 - core index']
  #allocation1 [shape = 'u32[144,128]{1,0:T(1,128)}', space=vmem, size = 0x12000, scoped, tag = 'internal scratch']
  %s0 = inlined_call_operand.hbm [shape: f32[1,2048], index: 0, kind: input, shape index: {}]
  %s1 = inlined_call_operand.hbm [shape: f32[1,2048], index: 1, kind: output, shape index: {}]
  %s2 = sld [smem:[#allocation0]]
  $region18: #{tpu_custom_call.1} parent=0
    _
  %s4 = ssub.s32 1, %s2
  %s5 = scalar_select 0, %s4, %s2
  $region1: #{tpu_custom_call.1} parent=0
    #allocation2 [shape = 'u8[8192]{0}', space=vmem, size = 0x2000, scoped, tag = 'input window, operand 0, single buffered']
    #allocation3 [shape = 's32[1]{0}', space=sflag, size = 0x4, scoped, tag = 'scoped memory for tpu_custom_call.1']
    #allocation4 [shape = 's32[1]{0}', space=sflag, size = 0x4, scoped, tag = 'scoped memory for tpu_custom_call.1']
    #allocation5 [shape = 'u8[8192]{0}', space=vmem, size = 0x2000, scoped, tag = 'output window, operand 0, single buffered']
    %6 = vsyncpa [#allocation3], 0
    %7 = vsyncpa [#allocation4], 0
    // Predicated region
    $region2: #{tpu_custom_call.1} parent=1 // pred_check
      _
    $region3: #{tpu_custom_call.1} parent=1 // pred_check_branch
      %9 = sbr.rel (0) target = $region5
    $region4: #{tpu_custom_call.1} parent=1 // pred_region
      %s11 = ssub.s32 256, 256
      %12 = vsyncadd [#allocation3], %s11
      %s14 = sshll.u32 [#allocation2], 4
      %s15 = int_to_ptr.vmem [resolvable:$true] %s14
      %17 = dma.hbm_to_vmem [thread:$0]  %s0, 256, %s15, [#allocation3]
    $region5: #{tpu_custom_call.1} parent=1 // pred_fallthru
      _
    // Predicated region
    $region6: #{tpu_custom_call.1} parent=1 // pred_check
      _
    $region7: #{tpu_custom_call.1} parent=1 // pred_check_branch
      %19 = sbr.rel (0) target = $region9
    $region8: #{tpu_custom_call.1} parent=1 // pred_region
      %20 = dma.done [#allocation3], 256
    $region9: #{tpu_custom_call.1} parent=1 // pred_fallthru
      _
    %v21 = vld [vmem:[#allocation2] sm:$0xff]
    %v22 = vld [vmem:[#allocation2 + $0x8] sm:$0xff]
    %v23 = vmax.f32 %v21, 0.0
    %v24 = vmax.f32 %v22, 0.0
    %25 = vst [vmem:[#allocation5] sm:$0xff] %v23
    %26 = vst [vmem:[#allocation5 + $0x8] sm:$0xff] %v24
    // Predicated region
    $region10: #{tpu_custom_call.1} parent=1 // pred_check
      _
    $region11: #{tpu_custom_call.1} parent=1 // pred_check_branch
      %28 = sbr.rel (0) target = $region13
    $region12: #{tpu_custom_call.1} parent=1 // pred_region
      %s30 = ssub.s32 256, 256
      %31 = vsyncadd [#allocation4], %s30
      %s33 = sshll.u32 [#allocation5], 4
      %s34 = int_to_ptr.vmem [resolvable:$true] %s33
      %36 = dma.vmem_to_hbm [thread:$0]  %s34, 256, %s1, [#allocation4]
    $region13: #{tpu_custom_call.1} parent=1 // pred_fallthru
      _
    // Predicated region
    $region14: #{tpu_custom_call.1} parent=1 // pred_check
      _
    $region15: #{tpu_custom_call.1} parent=1 // pred_check_branch
      %38 = sbr.rel (0) target = $region17
    $region16: #{tpu_custom_call.1} parent=1 // pred_region
      %39 = dma.done [#allocation4], 256
    $region17: #{tpu_custom_call.1} parent=1 // pred_fallthru
      _
    %40 = vsyncpa [#allocation3], 1
    %41 = vsyncpa [#allocation4], 1

</llo_original>
